<compile_context>
chip_gen: v6e
topology: v6e:2x2x1
jax: 0.10.0
libtpu: 0.0.40
codegen_flags: <defaults>
</compile_context>

<pallas_src>
import functools

import jax
import jax.numpy as jnp
from jax.experimental import pallas as pl
from jax.experimental.pallas import tpu as pltpu


def _dino_kernel(student_ref, teacher_ref, center_ref,          # inputs
                 loss_ref, csum_ref,                             # outputs
                 expt_ref, mt_ref, zt_ref, alpha_ref,            # teacher scratch
                 ms_ref, zs_ref, a0_ref, a1_ref, *,              # per-crop scratch
                 inv_student_temp, inv_teacher_temp, loss_scale):
    dt = pl.program_id(1)          # D-tile index (arbitrary)
    v = pl.program_id(2)           # student crop index (arbitrary, innermost)
    n_dt = pl.num_programs(1)

    tb = student_ref.shape[1]
    td = student_ref.shape[2]

    # ---- zero the per-block loss accumulator at the first step of this block ----
    @pl.when(jnp.logical_and(dt == 0, v == 0))
    def _():
        loss_ref[...] = jnp.zeros_like(loss_ref)

    # ---- teacher tile: processed once per (block, d-tile), cached for all crops ----
    @pl.when(v == 0)
    def _():
        @pl.when(dt == 0)
        def _():
            mt_ref[...] = jnp.full(mt_ref.shape, -jnp.inf, jnp.float32)
            zt_ref[...] = jnp.zeros(zt_ref.shape, jnp.float32)

        teacher = teacher_ref[...].astype(jnp.float32)            # (2, tb, td)
        center = center_ref[...].astype(jnp.float32)              # (1, td)
        t = (teacher - center.reshape(1, 1, td)) * inv_teacher_temp
        tile_max = jnp.max(t, axis=-1, keepdims=True)              # (2, tb, 1)
        m_old = mt_ref[...]
        m_new = jnp.maximum(m_old, tile_max)
        alpha = jnp.exp(m_old - m_new)                             # 0 on first tile
        e = jnp.exp(t - m_new)                                     # (2, tb, td)
        zt_ref[...] = alpha * zt_ref[...] + jnp.sum(e, axis=-1, keepdims=True)
        mt_ref[...] = m_new
        alpha_ref[...] = alpha
        expt_ref[...] = e

        # Raw-teacher column sum for the center EMA (sublane reduce keeps the
        # vector-extended slot free for the softmax lane reductions).
        csum = jnp.sum(teacher[0] + teacher[1], axis=0, keepdims=True)   # (1, td)
        csum_ref[...] = jnp.broadcast_to(csum.reshape(1, 1, td), csum_ref.shape)

    # ---- per-crop accumulator init on the first D tile of this block ----
    @pl.when(dt == 0)
    def _():
        ms_ref[v] = jnp.full((tb, 1), -jnp.inf, jnp.float32)
        zs_ref[v] = jnp.zeros((tb, 1), jnp.float32)
        a0_ref[v] = jnp.zeros((tb, 1), jnp.float32)
        a1_ref[v] = jnp.zeros((tb, 1), jnp.float32)

    # ---- student crop tile: online LSE + teacher cross terms ----
    s = student_ref[0].astype(jnp.float32) * inv_student_temp      # (tb, td)
    s_tile_max = jnp.max(s, axis=-1, keepdims=True)                # (tb, 1)
    ms_old = ms_ref[v]
    ms_new = jnp.maximum(ms_old, s_tile_max)
    beta = jnp.exp(ms_old - ms_new)
    es = jnp.exp(s - ms_new)
    zs_ref[v] = beta * zs_ref[v] + jnp.sum(es, axis=-1, keepdims=True)
    ms_ref[v] = ms_new

    alpha = alpha_ref[...]                                          # (2, tb, 1)
    cross0 = jnp.sum(expt_ref[0] * s, axis=-1, keepdims=True)       # (tb, 1)
    cross1 = jnp.sum(expt_ref[1] * s, axis=-1, keepdims=True)
    a0_ref[v] = alpha[0] * a0_ref[v] + cross0
    a1_ref[v] = alpha[1] * a1_ref[v] + cross1

    # ---- finalize this crop's contribution on the last D tile ----
    @pl.when(dt == n_dt - 1)
    def _():
        lse = ms_ref[v] + jnp.log(zs_ref[v])                        # (tb, 1)
        ce0 = lse - a0_ref[v] / zt_ref[0]                           # teacher crop 0
        ce1 = lse - a1_ref[v] / zt_ref[1]                           # teacher crop 1
        w0 = jnp.where(v != 0, 1.0, 0.0)                            # skip v == iq
        w1 = jnp.where(v != 1, 1.0, 0.0)
        contrib = jnp.sum(w0 * ce0 + w1 * ce1) * loss_scale
        loss_ref[...] = loss_ref[...] + contrib


def _candidates(n, unit, cap):
    hi = min(n, cap)
    hi -= hi % unit
    cands = [k for k in range(hi, 0, -unit) if n % k == 0]
    if n not in cands:
        cands.append(n)        # full extent is always a legal block shape
    return cands


def dino_loss(student_output, teacher_output, center, *,
              ncrops, teacher_temp, student_temp=0.1, center_momentum=0.9,
              block_rows=None, block_lanes=None):
    """Returns (total_loss scalar, updated center (1, D) float32)."""
    two_b, d = teacher_output.shape
    batch = two_b // 2
    assert two_b == 2 * batch
    assert student_output.shape == (ncrops * batch, d)
    assert center.shape == (1, d)

    # Crops on the leading axis: no sublane-offset slicing inside the kernel.
    student3 = student_output.reshape(ncrops, batch, d)
    teacher3 = teacher_output.reshape(2, batch, d)
    itemsize = jnp.dtype(student_output.dtype).itemsize

    # --- VMEM budget per generation (48 MiB request on 64 MiB cores, ~100 MiB on 128 MiB cores).
    try:
        vmem_cap = int(pltpu.get_tpu_info().vmem_capacity_bytes)
    except Exception:
        vmem_cap = 64 * 1024 * 1024
    vmem_limit = 48 * 1024 * 1024 if vmem_cap <= 64 * 1024 * 1024 else 100 * 1024 * 1024
    budget = (2 * vmem_limit) // 3   # headroom for double buffers + compiler scratch

    def footprint(tb, td):
        in_bytes = 2 * (3 * tb * td) * itemsize + 2 * td * itemsize   # dbl-buffered blocks
        out_bytes = 2 * 4 * (8 * 128 + 8 * td)
        scratch = 4 * (2 * tb * td) + 4 * ((6 + 4 * ncrops) * tb * 128)
        interm = 4 * 6 * tb * td                                      # live f32 temporaries
        return in_bytes + out_bytes + scratch + interm

    row_unit = 16 if itemsize == 2 else 8     # bf16 sublane packing
    lane_cands = ([block_lanes] if block_lanes is not None
                  else (_candidates(d, 128, 4096) if d % 128 == 0 else [d]))
    row_cands = ([block_rows] if block_rows is not None
                 else _candidates(batch, row_unit, 512))

    tb = td = None
    for cand_td in lane_cands:
        fitting = [r for r in row_cands if footprint(r, cand_td) <= budget]
        if not fitting:
            continue
        multi = [r for r in fitting if batch // r >= 2]   # keep >=2 blocks for megacore
        tb, td = (multi[0] if multi else fitting[0]), cand_td
        break
    if tb is None:
        tb, td = row_cands[-1], lane_cands[-1]
    assert batch % tb == 0 and d % td == 0
    num_blocks = batch // tb
    num_dt = d // td

    n_terms = 2 * (ncrops - 1)
    loss_scale = 1.0 / float(n_terms * batch)

    kernel = functools.partial(
        _dino_kernel,
        inv_student_temp=1.0 / float(student_temp),
        inv_teacher_temp=1.0 / float(teacher_temp),
        loss_scale=loss_scale)

    cost = pl.CostEstimate(
        flops=int(8 * (ncrops + 2) * batch * d),
        transcendentals=int((ncrops + 2) * batch * d),
        bytes_accessed=int((ncrops + 2) * batch * d * itemsize
                           + num_blocks * (8 * 128 + 8 * d) * 4))

    loss_parts, center_parts = pl.pallas_call(
        kernel,
        grid=(num_blocks, num_dt, ncrops),
        in_specs=[
            pl.BlockSpec((1, tb, td), lambda i, k, v: (v, i, k)),   # one student crop tile
            pl.BlockSpec((2, tb, td), lambda i, k, v: (0, i, k)),   # teacher (index ignores v)
            pl.BlockSpec((1, td), lambda i, k, v: (0, k)),          # center D tile
        ],
        out_specs=(
            pl.BlockSpec((1, 8, 128), lambda i, k, v: (i, 0, 0)),   # per-block loss partial
            pl.BlockSpec((1, 8, td), lambda i, k, v: (i, 0, k)),    # per-block column sums
        ),
        out_shape=(jax.ShapeDtypeStruct((num_blocks, 8, 128), jnp.float32),
                   jax.ShapeDtypeStruct((num_blocks, 8, d), jnp.float32)),
        scratch_shapes=[
            pltpu.VMEM((2, tb, td), jnp.float32),       # cached exp(t - mT)
            pltpu.VMEM((2, tb, 1), jnp.float32),        # running teacher max mT
            pltpu.VMEM((2, tb, 1), jnp.float32),        # running teacher denom ZT
            pltpu.VMEM((2, tb, 1), jnp.float32),        # teacher rescale alpha (this d-tile)
            pltpu.VMEM((ncrops, tb, 1), jnp.float32),   # per-crop running max mS
            pltpu.VMEM((ncrops, tb, 1), jnp.float32),   # per-crop running denom ZS
            pltpu.VMEM((ncrops, tb, 1), jnp.float32),   # per-crop cross term A0
            pltpu.VMEM((ncrops, tb, 1), jnp.float32),   # per-crop cross term A1
        ],
        compiler_params=pltpu.CompilerParams(
            dimension_semantics=("parallel", "arbitrary", "arbitrary"),
            vmem_limit_bytes=int(vmem_limit)),
        cost_estimate=cost,
    )(student3, teacher3, center)

    # Tiny final reductions + center EMA in plain JAX.
    total_loss = jnp.sum(loss_parts[:, 0, 0])
    batch_center = jnp.sum(center_parts[:, 0, :], axis=0, keepdims=True) / float(two_b)
    new_center = (center.astype(jnp.float32) * center_momentum
                  + batch_center * (1.0 - center_momentum))
    return total_loss, new_center


def _reference(student_output, teacher_output, center, *,
               ncrops, teacher_temp, student_temp, center_momentum):
    """Pure-JAX mirror of the PyTorch forward, for validation."""
    two_b, _ = teacher_output.shape
    batch = two_b // 2
    s = student_output / student_temp
    logp = jax.nn.log_softmax(s, axis=-1)
    q = jax.nn.softmax((teacher_output - center) / teacher_temp, axis=-1)
    total, n = 0.0, 0
    for iq in range(2):
        qc = q[iq * batch:(iq + 1) * batch]
        for v in range(ncrops):
            if v == iq:
                continue
            lp = logp[v * batch:(v + 1) * batch]
            total = total + jnp.mean(jnp.sum(-qc * lp, axis=-1))
            n += 1
    total = total / n
    bc = jnp.sum(teacher_output, axis=0, keepdims=True) / two_b
    new_center = center * center_momentum + bc * (1 - center_momentum)
    return total, new_center


if __name__ == "__main__":
    # Small, deterministic example shapes.
    ncrops = 4            # 2 global + 2 local crops
    batch = 16            # per-crop batch size
    out_dim = 256
    teacher_temp = 0.04
    student_temp = 0.1
    center_momentum = 0.9

    key = jax.random.PRNGKey(0)
    k1, k2, k3 = jax.random.split(key, 3)
    student_output = jax.random.normal(k1, (ncrops * batch, out_dim), jnp.float32)
    teacher_output = jax.random.normal(k2, (2 * batch, out_dim), jnp.float32)
    center = 0.1 * jax.random.normal(k3, (1, out_dim), jnp.float32)

    # Force 2 batch blocks and 2 D tiles so the parallel batch axis, the cached
    # teacher softmax and the online (flash-style) D accumulation are all
    # exercised even at these small shapes.
    loss, new_center = dino_loss(
        student_output, teacher_output, center,
        ncrops=ncrops, teacher_temp=teacher_temp,
        student_temp=student_temp, center_momentum=center_momentum,
        block_rows=8, block_lanes=128)
    jax.block_until_ready((loss, new_center))

    ref_loss, ref_center = _reference(
        student_output, teacher_output, center,
        ncrops=ncrops, teacher_temp=teacher_temp,
        student_temp=student_temp, center_momentum=center_momentum)

    assert jnp.allclose(loss, ref_loss, rtol=1e-4, atol=1e-4), (loss, ref_loss)
    assert jnp.allclose(new_center, ref_center, rtol=1e-5, atol=1e-5)

    print("KERNEL_OK")
</pallas_src>

<mosaic_0001>
module attributes {stable_mosaic.version = 11 : i64} {
  func.func @_dino_kernel(%arg0: i32, %arg1: i32, %arg2: i32, %arg3: memref<1x8x128xf32, #tpu.memory_space<vmem>>, %arg4: memref<2x8x128xf32, #tpu.memory_space<vmem>>, %arg5: memref<1x128xf32, #tpu.memory_space<vmem>>, %arg6: memref<1x8x128xf32, #tpu.memory_space<vmem>>, %arg7: memref<1x8x128xf32, #tpu.memory_space<vmem>>, %arg8: memref<2x8x128xf32, #tpu.memory_space<vmem>>, %arg9: memref<2x8x1xf32, #tpu.memory_space<vmem>>, %arg10: memref<2x8x1xf32, #tpu.memory_space<vmem>>, %arg11: memref<2x8x1xf32, #tpu.memory_space<vmem>>, %arg12: memref<4x8x1xf32, #tpu.memory_space<vmem>>, %arg13: memref<4x8x1xf32, #tpu.memory_space<vmem>>, %arg14: memref<4x8x1xf32, #tpu.memory_space<vmem>>, %arg15: memref<4x8x1xf32, #tpu.memory_space<vmem>>) attributes {dimension_semantics = [#tpu.dimension_semantics<parallel>, #tpu.dimension_semantics<arbitrary>, #tpu.dimension_semantics<arbitrary>], iteration_bounds = array<i64: 2, 2, 4>, scalar_prefetch = 0 : i64, scratch_operands = 8 : i64, tpu.core_type = #tpu.core_type<tc>, window_params = [{transform_indices = @transform_0, window_bounds = array<i64: 1, 8, 128>}, {transform_indices = @transform_1, window_bounds = array<i64: 2, 8, 128>}, {transform_indices = @transform_2, window_bounds = array<i64: 1, 128>}, {transform_indices = @transform_3, window_bounds = array<i64: 1, 8, 128>}, {transform_indices = @transform_4, window_bounds = array<i64: 1, 8, 128>}]} {
    %c0_i32 = arith.constant 0 : i32
    %0 = arith.cmpi eq, %arg1, %c0_i32 : i32
    %c0_i32_0 = arith.constant 0 : i32
    %1 = arith.cmpi eq, %arg2, %c0_i32_0 : i32
    %2 = arith.andi %0, %1 : i1
    %3 = arith.extui %2 : i1 to i32
    %c0_i32_1 = arith.constant 0 : i32
    %4 = arith.cmpi ne, %3, %c0_i32_1 : i32
    scf.if %4 {
      %cst_37 = arith.constant 0.000000e+00 : f32
      %77 = vector.broadcast %cst_37 : f32 to vector<1x8x128xf32>
      %c0_38 = arith.constant 0 : index
      %c0_39 = arith.constant 0 : index
      %c0_40 = arith.constant 0 : index
      %78 = vector.load %arg6[%c0_38, %c0_39, %c0_40] : memref<1x8x128xf32, #tpu.memory_space<vmem>>, vector<1x8x128xf32>
      tpu.vector_store %arg6[%c0_38, %c0_39, %c0_40], %77 {strides = array<i32>} : memref<1x8x128xf32, #tpu.memory_space<vmem>>, vector<1x8x128xf32>,
    } else {
    }
    %c0_i32_2 = arith.constant 0 : i32
    %5 = arith.cmpi eq, %arg2, %c0_i32_2 : i32
    %6 = arith.extui %5 : i1 to i32
    %c0_i32_3 = arith.constant 0 : i32
    %7 = arith.cmpi ne, %6, %c0_i32_3 : i32
    scf.if %7 {
      %c0_i32_37 = arith.constant 0 : i32
      %77 = arith.cmpi eq, %arg1, %c0_i32_37 : i32
      %78 = arith.extui %77 : i1 to i32
      %c0_i32_38 = arith.constant 0 : i32
      %79 = arith.cmpi ne, %78, %c0_i32_38 : i32
      scf.if %79 {
        %cst_69 = arith.constant 0xFF800000 : f32
        %116 = vector.broadcast %cst_69 : f32 to vector<2x8x1xf32>
        %c0_70 = arith.constant 0 : index
        %c0_71 = arith.constant 0 : index
        %c0_72 = arith.constant 0 : index
        %117 = vector.load %arg9[%c0_70, %c0_71, %c0_72] : memref<2x8x1xf32, #tpu.memory_space<vmem>>, vector<2x8x1xf32>
        tpu.vector_store %arg9[%c0_70, %c0_71, %c0_72], %116 {strides = array<i32>} : memref<2x8x1xf32, #tpu.memory_space<vmem>>, vector<2x8x1xf32>,
        %cst_73 = arith.constant 0.000000e+00 : f32
        %118 = vector.broadcast %cst_73 : f32 to vector<2x8x1xf32>
        %c0_74 = arith.constant 0 : index
        %c0_75 = arith.constant 0 : index
        %c0_76 = arith.constant 0 : index
        %119 = vector.load %arg10[%c0_74, %c0_75, %c0_76] : memref<2x8x1xf32, #tpu.memory_space<vmem>>, vector<2x8x1xf32>
        tpu.vector_store %arg10[%c0_74, %c0_75, %c0_76], %118 {strides = array<i32>} : memref<2x8x1xf32, #tpu.memory_space<vmem>>, vector<2x8x1xf32>,
      } else {
      }
      %c0_39 = arith.constant 0 : index
      %c0_40 = arith.constant 0 : index
      %c0_41 = arith.constant 0 : index
      %80 = vector.load %arg4[%c0_39, %c0_40, %c0_41] : memref<2x8x128xf32, #tpu.memory_space<vmem>>, vector<2x8x128xf32>
      %c0_42 = arith.constant 0 : index
      %c0_43 = arith.constant 0 : index
      %81 = vector.load %arg5[%c0_42, %c0_43] : memref<1x128xf32, #tpu.memory_space<vmem>>, vector<1x128xf32>
      %82 = vector.shape_cast %81 : vector<1x128xf32> to vector<1x1x128xf32>
      %83 = vector.broadcast %82 : vector<1x1x128xf32> to vector<2x8x128xf32>
      %84 = arith.subf %80, %83 : vector<2x8x128xf32>
      %cst_44 = arith.constant 2.500000e+01 : f32
      %85 = vector.broadcast %cst_44 : f32 to vector<2x8x128xf32>
      %86 = arith.mulf %84, %85 : vector<2x8x128xf32>
      %cst_45 = arith.constant dense<0xFF800000> : vector<2x8xf32>
      %87 = vector.multi_reduction <maximumf>, %86, %cst_45 [2] : vector<2x8x128xf32> to vector<2x8xf32>
      %88 = vector.shape_cast %87 : vector<2x8xf32> to vector<2x8x1xf32>
      %c0_46 = arith.constant 0 : index
      %c0_47 = arith.constant 0 : index
      %c0_48 = arith.constant 0 : index
      %89 = vector.load %arg9[%c0_46, %c0_47, %c0_48] : memref<2x8x1xf32, #tpu.memory_space<vmem>>, vector<2x8x1xf32>
      %90 = arith.maximumf %89, %88 : vector<2x8x1xf32>
      %91 = arith.subf %89, %90 : vector<2x8x1xf32>
      %92 = math.exp %91 : vector<2x8x1xf32>
      %93 = vector.broadcast %90 : vector<2x8x1xf32> to vector<2x8x128xf32>
      %94 = arith.subf %86, %93 : vector<2x8x128xf32>
      %95 = math.exp %94 : vector<2x8x128xf32>
      %c0_49 = arith.constant 0 : index
      %c0_50 = arith.constant 0 : index
      %c0_51 = arith.constant 0 : index
      %96 = vector.load %arg10[%c0_49, %c0_50, %c0_51] : memref<2x8x1xf32, #tpu.memory_space<vmem>>, vector<2x8x1xf32>
      %97 = arith.mulf %92, %96 : vector<2x8x1xf32>
      %cst_52 = arith.constant dense<0.000000e+00> : vector<2x8xf32>
      %98 = vector.multi_reduction <add>, %95, %cst_52 [2] : vector<2x8x128xf32> to vector<2x8xf32>
      %99 = vector.shape_cast %98 : vector<2x8xf32> to vector<2x8x1xf32>
      %100 = arith.addf %97, %99 : vector<2x8x1xf32>
      %c0_53 = arith.constant 0 : index
      %c0_54 = arith.constant 0 : index
      %c0_55 = arith.constant 0 : index
      %101 = vector.load %arg10[%c0_53, %c0_54, %c0_55] : memref<2x8x1xf32, #tpu.memory_space<vmem>>, vector<2x8x1xf32>
      tpu.vector_store %arg10[%c0_53, %c0_54, %c0_55], %100 {strides = array<i32>} : memref<2x8x1xf32, #tpu.memory_space<vmem>>, vector<2x8x1xf32>,
      %c0_56 = arith.constant 0 : index
      %c0_57 = arith.constant 0 : index
      %c0_58 = arith.constant 0 : index
      %102 = vector.load %arg9[%c0_56, %c0_57, %c0_58] : memref<2x8x1xf32, #tpu.memory_space<vmem>>, vector<2x8x1xf32>
      tpu.vector_store %arg9[%c0_56, %c0_57, %c0_58], %90 {strides = array<i32>} : memref<2x8x1xf32, #tpu.memory_space<vmem>>, vector<2x8x1xf32>,
      %c0_59 = arith.constant 0 : index
      %c0_60 = arith.constant 0 : index
      %c0_61 = arith.constant 0 : index
      %103 = vector.load %arg11[%c0_59, %c0_60, %c0_61] : memref<2x8x1xf32, #tpu.memory_space<vmem>>, vector<2x8x1xf32>
      tpu.vector_store %arg11[%c0_59, %c0_60, %c0_61], %92 {strides = array<i32>} : memref<2x8x1xf32, #tpu.memory_space<vmem>>, vector<2x8x1xf32>,
      %c0_62 = arith.constant 0 : index
      %c0_63 = arith.constant 0 : index
      %c0_64 = arith.constant 0 : index
      %104 = vector.load %arg8[%c0_62, %c0_63, %c0_64] : memref<2x8x128xf32, #tpu.memory_space<vmem>>, vector<2x8x128xf32>
      tpu.vector_store %arg8[%c0_62, %c0_63, %c0_64], %95 {strides = array<i32>} : memref<2x8x128xf32, #tpu.memory_space<vmem>>, vector<2x8x128xf32>,
      %105 = vector.extract_strided_slice %80 {offsets = [0, 0, 0], sizes = [1, 8, 128], strides = [1, 1, 1]} : vector<2x8x128xf32> to vector<1x8x128xf32>
      %106 = vector.shape_cast %105 : vector<1x8x128xf32> to vector<8x128xf32>
      %107 = vector.extract_strided_slice %80 {offsets = [1, 0, 0], sizes = [1, 8, 128], strides = [1, 1, 1]} : vector<2x8x128xf32> to vector<1x8x128xf32>
      %108 = vector.shape_cast %107 : vector<1x8x128xf32> to vector<8x128xf32>
      %109 = arith.addf %106, %108 : vector<8x128xf32>
      %cst_65 = arith.constant dense<0.000000e+00> : vector<128xf32>
      %110 = vector.multi_reduction <add>, %109, %cst_65 [0] : vector<8x128xf32> to vector<128xf32>
      %111 = vector.shape_cast %110 : vector<128xf32> to vector<1x128xf32>
      %112 = vector.shape_cast %111 : vector<1x128xf32> to vector<1x1x128xf32>
      %113 = vector.shape_cast %112 : vector<1x1x128xf32> to vector<1x1x128xf32>
      %114 = vector.broadcast %113 : vector<1x1x128xf32> to vector<1x8x128xf32>
      %c0_66 = arith.constant 0 : index
      %c0_67 = arith.constant 0 : index
      %c0_68 = arith.constant 0 : index
      %115 = vector.load %arg7[%c0_66, %c0_67, %c0_68] : memref<1x8x128xf32, #tpu.memory_space<vmem>>, vector<1x8x128xf32>
      tpu.vector_store %arg7[%c0_66, %c0_67, %c0_68], %114 {strides = array<i32>} : memref<1x8x128xf32, #tpu.memory_space<vmem>>, vector<1x8x128xf32>,
    } else {
    }
    %c0_i32_4 = arith.constant 0 : i32
    %8 = arith.cmpi eq, %arg1, %c0_i32_4 : i32
    %9 = arith.extui %8 : i1 to i32
    %c0_i32_5 = arith.constant 0 : i32
    %10 = arith.cmpi ne, %9, %c0_i32_5 : i32
    scf.if %10 {
      %cst_37 = arith.constant 0xFF800000 : f32
      %77 = vector.broadcast %cst_37 : f32 to vector<8x1xf32>
      %78 = arith.index_cast %arg2 : i32 to index
      %c0_38 = arith.constant 0 : index
      %c0_39 = arith.constant 0 : index
      %79 = vector.load %arg12[%78, %c0_38, %c0_39] : memref<4x8x1xf32, #tpu.memory_space<vmem>>, vector<1x8x1xf32>
      %80 = vector.shape_cast %79 : vector<1x8x1xf32> to vector<8x1xf32>
      %81 = vector.shape_cast %77 : vector<8x1xf32> to vector<1x8x1xf32>
      tpu.vector_store %arg12[%78, %c0_38, %c0_39], %81 {strides = array<i32>} : memref<4x8x1xf32, #tpu.memory_space<vmem>>, vector<1x8x1xf32>,
      %cst_40 = arith.constant 0.000000e+00 : f32
      %82 = vector.broadcast %cst_40 : f32 to vector<8x1xf32>
      %83 = arith.index_cast %arg2 : i32 to index
      %c0_41 = arith.constant 0 : index
      %c0_42 = arith.constant 0 : index
      %84 = vector.load %arg13[%83, %c0_41, %c0_42] : memref<4x8x1xf32, #tpu.memory_space<vmem>>, vector<1x8x1xf32>
      %85 = vector.shape_cast %84 : vector<1x8x1xf32> to vector<8x1xf32>
      %86 = vector.shape_cast %82 : vector<8x1xf32> to vector<1x8x1xf32>
      tpu.vector_store %arg13[%83, %c0_41, %c0_42], %86 {strides = array<i32>} : memref<4x8x1xf32, #tpu.memory_space<vmem>>, vector<1x8x1xf32>,
      %cst_43 = arith.constant 0.000000e+00 : f32
      %87 = vector.broadcast %cst_43 : f32 to vector<8x1xf32>
      %88 = arith.index_cast %arg2 : i32 to index
      %c0_44 = arith.constant 0 : index
      %c0_45 = arith.constant 0 : index
      %89 = vector.load %arg14[%88, %c0_44, %c0_45] : memref<4x8x1xf32, #tpu.memory_space<vmem>>, vector<1x8x1xf32>
      %90 = vector.shape_cast %89 : vector<1x8x1xf32> to vector<8x1xf32>
      %91 = vector.shape_cast %87 : vector<8x1xf32> to vector<1x8x1xf32>
      tpu.vector_store %arg14[%88, %c0_44, %c0_45], %91 {strides = array<i32>} : memref<4x8x1xf32, #tpu.memory_space<vmem>>, vector<1x8x1xf32>,
      %cst_46 = arith.constant 0.000000e+00 : f32
      %92 = vector.broadcast %cst_46 : f32 to vector<8x1xf32>
      %93 = arith.index_cast %arg2 : i32 to index
      %c0_47 = arith.constant 0 : index
      %c0_48 = arith.constant 0 : index
      %94 = vector.load %arg15[%93, %c0_47, %c0_48] : memref<4x8x1xf32, #tpu.memory_space<vmem>>, vector<1x8x1xf32>
      %95 = vector.shape_cast %94 : vector<1x8x1xf32> to vector<8x1xf32>
      %96 = vector.shape_cast %92 : vector<8x1xf32> to vector<1x8x1xf32>
      tpu.vector_store %arg15[%93, %c0_47, %c0_48], %96 {strides = array<i32>} : memref<4x8x1xf32, #tpu.memory_space<vmem>>, vector<1x8x1xf32>,
    } else {
    }
    %c0 = arith.constant 0 : index
    %c0_6 = arith.constant 0 : index
    %c0_7 = arith.constant 0 : index
    %11 = vector.load %arg3[%c0, %c0_6, %c0_7] : memref<1x8x128xf32, #tpu.memory_space<vmem>>, vector<1x8x128xf32>
    %12 = vector.shape_cast %11 : vector<1x8x128xf32> to vector<8x128xf32>
    %cst = arith.constant 1.000000e+01 : f32
    %13 = vector.broadcast %cst : f32 to vector<8x128xf32>
    %14 = arith.mulf %12, %13 : vector<8x128xf32>
    %cst_8 = arith.constant dense<0xFF800000> : vector<8xf32>
    %15 = vector.multi_reduction <maximumf>, %14, %cst_8 [1] : vector<8x128xf32> to vector<8xf32>
    %16 = vector.shape_cast %15 : vector<8xf32> to vector<8x1xf32>
    %17 = arith.index_cast %arg2 : i32 to index
    %c0_9 = arith.constant 0 : index
    %c0_10 = arith.constant 0 : index
    %18 = vector.load %arg12[%17, %c0_9, %c0_10] : memref<4x8x1xf32, #tpu.memory_space<vmem>>, vector<1x8x1xf32>
    %19 = vector.shape_cast %18 : vector<1x8x1xf32> to vector<8x1xf32>
    %20 = arith.maximumf %19, %16 : vector<8x1xf32>
    %21 = arith.subf %19, %20 : vector<8x1xf32>
    %22 = math.exp %21 : vector<8x1xf32>
    %23 = vector.broadcast %20 : vector<8x1xf32> to vector<8x128xf32>
    %24 = arith.subf %14, %23 : vector<8x128xf32>
    %25 = math.exp %24 : vector<8x128xf32>
    %26 = arith.index_cast %arg2 : i32 to index
    %c0_11 = arith.constant 0 : index
    %c0_12 = arith.constant 0 : index
    %27 = vector.load %arg13[%26, %c0_11, %c0_12] : memref<4x8x1xf32, #tpu.memory_space<vmem>>, vector<1x8x1xf32>
    %28 = vector.shape_cast %27 : vector<1x8x1xf32> to vector<8x1xf32>
    %29 = arith.mulf %22, %28 : vector<8x1xf32>
    %cst_13 = arith.constant dense<0.000000e+00> : vector<8xf32>
    %30 = vector.multi_reduction <add>, %25, %cst_13 [1] : vector<8x128xf32> to vector<8xf32>
    %31 = vector.shape_cast %30 : vector<8xf32> to vector<8x1xf32>
    %32 = arith.addf %29, %31 : vector<8x1xf32>
    %33 = arith.index_cast %arg2 : i32 to index
    %c0_14 = arith.constant 0 : index
    %c0_15 = arith.constant 0 : index
    %34 = vector.load %arg13[%33, %c0_14, %c0_15] : memref<4x8x1xf32, #tpu.memory_space<vmem>>, vector<1x8x1xf32>
    %35 = vector.shape_cast %34 : vector<1x8x1xf32> to vector<8x1xf32>
    %36 = vector.shape_cast %32 : vector<8x1xf32> to vector<1x8x1xf32>
    tpu.vector_store %arg13[%33, %c0_14, %c0_15], %36 {strides = array<i32>} : memref<4x8x1xf32, #tpu.memory_space<vmem>>, vector<1x8x1xf32>,
    %37 = arith.index_cast %arg2 : i32 to index
    %c0_16 = arith.constant 0 : index
    %c0_17 = arith.constant 0 : index
    %38 = vector.load %arg12[%37, %c0_16, %c0_17] : memref<4x8x1xf32, #tpu.memory_space<vmem>>, vector<1x8x1xf32>
    %39 = vector.shape_cast %38 : vector<1x8x1xf32> to vector<8x1xf32>
    %40 = vector.shape_cast %20 : vector<8x1xf32> to vector<1x8x1xf32>
    tpu.vector_store %arg12[%37, %c0_16, %c0_17], %40 {strides = array<i32>} : memref<4x8x1xf32, #tpu.memory_space<vmem>>, vector<1x8x1xf32>,
    %c0_18 = arith.constant 0 : index
    %c0_19 = arith.constant 0 : index
    %c0_20 = arith.constant 0 : index
    %41 = vector.load %arg11[%c0_18, %c0_19, %c0_20] : memref<2x8x1xf32, #tpu.memory_space<vmem>>, vector<2x8x1xf32>
    %c0_21 = arith.constant 0 : index
    %c0_22 = arith.constant 0 : index
    %c0_23 = arith.constant 0 : index
    %42 = vector.load %arg8[%c0_21, %c0_22, %c0_23] : memref<2x8x128xf32, #tpu.memory_space<vmem>>, vector<1x8x128xf32>
    %43 = vector.shape_cast %42 : vector<1x8x128xf32> to vector<8x128xf32>
    %44 = arith.mulf %43, %14 : vector<8x128xf32>
    %cst_24 = arith.constant dense<0.000000e+00> : vector<8xf32>
    %45 = vector.multi_reduction <add>, %44, %cst_24 [1] : vector<8x128xf32> to vector<8xf32>
    %46 = vector.shape_cast %45 : vector<8xf32> to vector<8x1xf32>
    %c1 = arith.constant 1 : index
    %c0_25 = arith.constant 0 : index
    %c0_26 = arith.constant 0 : index
    %47 = vector.load %arg8[%c1, %c0_25, %c0_26] : memref<2x8x128xf32, #tpu.memory_space<vmem>>, vector<1x8x128xf32>
    %48 = vector.shape_cast %47 : vector<1x8x128xf32> to vector<8x128xf32>
    %49 = arith.mulf %48, %14 : vector<8x128xf32>
    %cst_27 = arith.constant dense<0.000000e+00> : vector<8xf32>
    %50 = vector.multi_reduction <add>, %49, %cst_27 [1] : vector<8x128xf32> to vector<8xf32>
    %51 = vector.shape_cast %50 : vector<8xf32> to vector<8x1xf32>
    %52 = vector.extract_strided_slice %41 {offsets = [0, 0, 0], sizes = [1, 8, 1], strides = [1, 1, 1]} : vector<2x8x1xf32> to vector<1x8x1xf32>
    %53 = vector.shape_cast %52 : vector<1x8x1xf32> to vector<8x1xf32>
    %54 = arith.index_cast %arg2 : i32 to index
    %c0_28 = arith.constant 0 : index
    %c0_29 = arith.constant 0 : index
    %55 = vector.load %arg14[%54, %c0_28, %c0_29] : memref<4x8x1xf32, #tpu.memory_space<vmem>>, vector<1x8x1xf32>
    %56 = vector.shape_cast %55 : vector<1x8x1xf32> to vector<8x1xf32>
    %57 = arith.mulf %53, %56 : vector<8x1xf32>
    %58 = arith.addf %57, %46 : vector<8x1xf32>
    %59 = arith.index_cast %arg2 : i32 to index
    %c0_30 = arith.constant 0 : index
    %c0_31 = arith.constant 0 : index
    %60 = vector.load %arg14[%59, %c0_30, %c0_31] : memref<4x8x1xf32, #tpu.memory_space<vmem>>, vector<1x8x1xf32>
    %61 = vector.shape_cast %60 : vector<1x8x1xf32> to vector<8x1xf32>
    %62 = vector.shape_cast %58 : vector<8x1xf32> to vector<1x8x1xf32>
    tpu.vector_store %arg14[%59, %c0_30, %c0_31], %62 {strides = array<i32>} : memref<4x8x1xf32, #tpu.memory_space<vmem>>, vector<1x8x1xf32>,
    %63 = vector.extract_strided_slice %41 {offsets = [1, 0, 0], sizes = [1, 8, 1], strides = [1, 1, 1]} : vector<2x8x1xf32> to vector<1x8x1xf32>
    %64 = vector.shape_cast %63 : vector<1x8x1xf32> to vector<8x1xf32>
    %65 = arith.index_cast %arg2 : i32 to index
    %c0_32 = arith.constant 0 : index
    %c0_33 = arith.constant 0 : index
    %66 = vector.load %arg15[%65, %c0_32, %c0_33] : memref<4x8x1xf32, #tpu.memory_space<vmem>>, vector<1x8x1xf32>
    %67 = vector.shape_cast %66 : vector<1x8x1xf32> to vector<8x1xf32>
    %68 = arith.mulf %64, %67 : vector<8x1xf32>
    %69 = arith.addf %68, %51 : vector<8x1xf32>
    %70 = arith.index_cast %arg2 : i32 to index
    %c0_34 = arith.constant 0 : index
    %c0_35 = arith.constant 0 : index
    %71 = vector.load %arg15[%70, %c0_34, %c0_35] : memref<4x8x1xf32, #tpu.memory_space<vmem>>, vector<1x8x1xf32>
    %72 = vector.shape_cast %71 : vector<1x8x1xf32> to vector<8x1xf32>
    %73 = vector.shape_cast %69 : vector<8x1xf32> to vector<1x8x1xf32>
    tpu.vector_store %arg15[%70, %c0_34, %c0_35], %73 {strides = array<i32>} : memref<4x8x1xf32, #tpu.memory_space<vmem>>, vector<1x8x1xf32>,
    %c1_i32 = arith.constant 1 : i32
    %74 = arith.cmpi eq, %arg1, %c1_i32 : i32
    %75 = arith.extui %74 : i1 to i32
    %c0_i32_36 = arith.constant 0 : i32
    %76 = arith.cmpi ne, %75, %c0_i32_36 : i32
    scf.if %76 {
      %77 = arith.index_cast %arg2 : i32 to index
      %c0_37 = arith.constant 0 : index
      %c0_38 = arith.constant 0 : index
      %78 = vector.load %arg12[%77, %c0_37, %c0_38] : memref<4x8x1xf32, #tpu.memory_space<vmem>>, vector<1x8x1xf32>
      %79 = vector.shape_cast %78 : vector<1x8x1xf32> to vector<8x1xf32>
      %80 = arith.index_cast %arg2 : i32 to index
      %c0_39 = arith.constant 0 : index
      %c0_40 = arith.constant 0 : index
      %81 = vector.load %arg13[%80, %c0_39, %c0_40] : memref<4x8x1xf32, #tpu.memory_space<vmem>>, vector<1x8x1xf32>
      %82 = vector.shape_cast %81 : vector<1x8x1xf32> to vector<8x1xf32>
      %83 = math.log %82 : vector<8x1xf32>
      %84 = arith.addf %79, %83 : vector<8x1xf32>
      %85 = arith.index_cast %arg2 : i32 to index
      %c0_41 = arith.constant 0 : index
      %c0_42 = arith.constant 0 : index
      %86 = vector.load %arg14[%85, %c0_41, %c0_42] : memref<4x8x1xf32, #tpu.memory_space<vmem>>, vector<1x8x1xf32>
      %87 = vector.shape_cast %86 : vector<1x8x1xf32> to vector<8x1xf32>
      %c0_43 = arith.constant 0 : index
      %c0_44 = arith.constant 0 : index
      %c0_45 = arith.constant 0 : index
      %88 = vector.load %arg10[%c0_43, %c0_44, %c0_45] : memref<2x8x1xf32, #tpu.memory_space<vmem>>, vector<1x8x1xf32>
      %89 = vector.shape_cast %88 : vector<1x8x1xf32> to vector<8x1xf32>
      %90 = arith.divf %87, %89 : vector<8x1xf32>
      %91 = arith.subf %84, %90 : vector<8x1xf32>
      %92 = arith.index_cast %arg2 : i32 to index
      %c0_46 = arith.constant 0 : index
      %c0_47 = arith.constant 0 : index
      %93 = vector.load %arg15[%92, %c0_46, %c0_47] : memref<4x8x1xf32, #tpu.memory_space<vmem>>, vector<1x8x1xf32>
      %94 = vector.shape_cast %93 : vector<1x8x1xf32> to vector<8x1xf32>
      %c1_48 = arith.constant 1 : index
      %c0_49 = arith.constant 0 : index
      %c0_50 = arith.constant 0 : index
      %95 = vector.load %arg10[%c1_48, %c0_49, %c0_50] : memref<2x8x1xf32, #tpu.memory_space<vmem>>, vector<1x8x1xf32>
      %96 = vector.shape_cast %95 : vector<1x8x1xf32> to vector<8x1xf32>
      %97 = arith.divf %94, %96 : vector<8x1xf32>
      %98 = arith.subf %84, %97 : vector<8x1xf32>
      %c0_i32_51 = arith.constant 0 : i32
      %99 = arith.cmpi ne, %arg2, %c0_i32_51 : i32
      %cst_52 = arith.constant 1.000000e+00 : f32
      %cst_53 = arith.constant 0.000000e+00 : f32
      %100 = arith.select %99, %cst_52, %cst_53 : f32
      %c1_i32_54 = arith.constant 1 : i32
      %101 = arith.cmpi ne, %arg2, %c1_i32_54 : i32
      %cst_55 = arith.constant 1.000000e+00 : f32
      %cst_56 = arith.constant 0.000000e+00 : f32
      %102 = arith.select %101, %cst_55, %cst_56 : f32
      %103 = vector.broadcast %100 : f32 to vector<8x1xf32>
      %104 = arith.mulf %103, %91 : vector<8x1xf32>
      %105 = vector.broadcast %102 : f32 to vector<8x1xf32>
      %106 = arith.mulf %105, %98 : vector<8x1xf32>
      %107 = arith.addf %104, %106 : vector<8x1xf32>
      %108 = vector.shape_cast %107 : vector<8x1xf32> to vector<1x8x1xf32>
      %cst_57 = arith.constant dense<0.000000e+00> : vector<1xf32>
      %109 = vector.multi_reduction <add>, %108, %cst_57 [1, 2] : vector<1x8x1xf32> to vector<1xf32>
      %110 = vector.shape_cast %109 : vector<1xf32> to vector<1x1x1xf32>
      %111 = vector.extract %110[0, 0, 0] : f32 from vector<1x1x1xf32>
      %cst_58 = arith.constant 0.010416667 : f32
      %112 = arith.mulf %111, %cst_58 : f32
      %c0_59 = arith.constant 0 : index
      %c0_60 = arith.constant 0 : index
      %c0_61 = arith.constant 0 : index
      %113 = vector.load %arg6[%c0_59, %c0_60, %c0_61] : memref<1x8x128xf32, #tpu.memory_space<vmem>>, vector<1x8x128xf32>
      %114 = vector.broadcast %112 : f32 to vector<1x8x128xf32>
      %115 = arith.addf %113, %114 : vector<1x8x128xf32>
      %c0_62 = arith.constant 0 : index
      %c0_63 = arith.constant 0 : index
      %c0_64 = arith.constant 0 : index
      %116 = vector.load %arg6[%c0_62, %c0_63, %c0_64] : memref<1x8x128xf32, #tpu.memory_space<vmem>>, vector<1x8x128xf32>
      tpu.vector_store %arg6[%c0_62, %c0_63, %c0_64], %115 {strides = array<i32>} : memref<1x8x128xf32, #tpu.memory_space<vmem>>, vector<1x8x128xf32>,
    } else {
    }
    return
  }
  func.func @transform_0(%arg0: i32, %arg1: i32, %arg2: i32) -> (i32, i32, i32) {
    %c0_i32 = arith.constant 0 : i32
    return %arg2, %arg0, %arg1 : i32, i32, i32
  }
  func.func @transform_1(%arg0: i32, %arg1: i32, %arg2: i32) -> (i32, i32, i32) {
    %c0_i32 = arith.constant 0 : i32
    %c0_i32_0 = arith.constant 0 : i32
    return %c0_i32, %arg0, %arg1 : i32, i32, i32
  }
  func.func @transform_2(%arg0: i32, %arg1: i32, %arg2: i32) -> (i32, i32) {
    %c0_i32 = arith.constant 0 : i32
    %c0_i32_0 = arith.constant 0 : i32
    return %c0_i32, %arg1 : i32, i32
  }
  func.func @transform_3(%arg0: i32, %arg1: i32, %arg2: i32) -> (i32, i32, i32) {
    %c0_i32 = arith.constant 0 : i32
    %c0_i32_0 = arith.constant 0 : i32
    %c0_i32_1 = arith.constant 0 : i32
    return %arg0, %c0_i32, %c0_i32_0 : i32, i32, i32
  }
  func.func @transform_4(%arg0: i32, %arg1: i32, %arg2: i32) -> (i32, i32, i32) {
    %c0_i32 = arith.constant 0 : i32
    %c0_i32_0 = arith.constant 0 : i32
    return %arg0, %c0_i32, %arg1 : i32, i32, i32
  }
}

</mosaic_0001>

<llo_original>
// kernel: tpu_custom_call.1
$region0: #{tpu_custom_call.1}
  #allocation0 [shape = 'u32[]', space=smem, size = 0x4, offset = 0x4, fixed_abs, tag = 'smem constant byte address 0x4 - core index']
  #allocation1 [shape = 'u32[144,128]{1,0:T(1,128)}', space=vmem, size = 0x12000, scoped, tag = 'internal scratch']
  #allocation2 [shape = 'f32[2,8,128]{2,1,0:T(8,128)}', space=vmem, size = 0x2000, scoped, tag = 'scratch operand']
  #allocation3 [shape = 'f32[2,8,1]{2,1,0:T(8,128)}', space=vmem, size = 0x2000, scoped, tag = 'scratch operand']
  #allocation4 [shape = 'f32[2,8,1]{2,1,0:T(8,128)}', space=vmem, size = 0x2000, scoped, tag = 'scratch operand']
  #allocation5 [shape = 'f32[2,8,1]{2,1,0:T(8,128)}', space=vmem, size = 0x2000, scoped, tag = 'scratch operand']
  #allocation6 [shape = 'f32[4,8,1]{2,1,0:T(8,128)}', space=vmem, size = 0x4000, scoped, tag = 'scratch operand']
  #allocation7 [shape = 'f32[4,8,1]{2,1,0:T(8,128)}', space=vmem, size = 0x4000, scoped, tag = 'scratch operand']
  #allocation8 [shape = 'f32[4,8,1]{2,1,0:T(8,128)}', space=vmem, size = 0x4000, scoped, tag = 'scratch operand']
  #allocation9 [shape = 'f32[4,8,1]{2,1,0:T(8,128)}', space=vmem, size = 0x4000, scoped, tag = 'scratch operand']
  %s0 = inlined_call_operand.hbm [shape: f32[4,16,256], index: 0, kind: input, shape index: {}]
  %s1 = inlined_call_operand.hbm [shape: f32[2,16,256], index: 1, kind: input, shape index: {}]
  %s2 = inlined_call_operand.vmem [shape: f32[1,256], index: 2, kind: input, shape index: {}]
  %s3 = inlined_call_operand.hbm [shape: f32[2,8,128], index: 3, kind: output, shape index: {0}]
  %s4 = inlined_call_operand.hbm [shape: f32[2,8,256], index: 4, kind: output, shape index: {1}]
  %5 = xla_tuple %s3, %s4
  %s6 = sld [smem:[#allocation0]]
  $region81: #{tpu_custom_call.1} parent=0
    _
  %s8 = ssub.s32 1, %s6
  %s9 = scalar_select 0, %s8, %s6
  $region1: #{tpu_custom_call.1} parent=0
    #allocation10 [shape = 'u8[8192]{0}', space=vmem, size = 0x2000, scoped, tag = 'input window, operand 0']
    #allocation11 [shape = 's32[2]{0}', space=sflag, size = 0x8, scoped, tag = 'scoped memory for tpu_custom_call.1']
    #allocation12 [shape = 's32[2]{0}', space=sflag, size = 0x8, scoped, tag = 'scoped memory for tpu_custom_call.1']
    #allocation13 [shape = 'u8[16384]{0}', space=vmem, size = 0x4000, scoped, tag = 'input window, operand 1']
    #allocation14 [shape = 's32[2]{0}', space=sflag, size = 0x8, scoped, tag = 'scoped memory for tpu_custom_call.1']
    #allocation15 [shape = 'u8[8192]{0}', space=vmem, size = 0x2000, scoped, tag = 'output window, operand 0']
    #allocation16 [shape = 'u8[8192]{0}', space=vmem, size = 0x2000, scoped, tag = 'output window, operand 1']
    #allocation17 [shape = 's32[2]{0}', space=sflag, size = 0x8, scoped, tag = 'scoped memory for tpu_custom_call.1']
    %10 = vsyncpa [#allocation11], 0
    %s11 = scalar_lea.sflag [#allocation11], 1
    %12 = vsyncpa %s11, 0
    %13 = vsyncpa [#allocation14], 0
    %s14 = scalar_lea.sflag [#allocation14], 1
    %15 = vsyncpa %s14, 0
    %16 = vsyncpa [#allocation12], 0
    %s17 = scalar_lea.sflag [#allocation12], 1
    %18 = vsyncpa %s17, 0
    %19 = vsyncpa [#allocation17], 0
    %s20 = scalar_lea.sflag [#allocation17], 1
    %21 = vsyncpa %s20, 0
    loop: start=0, step=1, limit=18
    $region2: #{tpu_custom_call.1} parent=1 // loop_pre_header
      _
    $region3: #{tpu_custom_call.1} parent=1 // loop_header
      %s23 = sphi 0, %s27
      %p24 = scmp.ge.s32.totalorder %s23, 18
      %s30 = sphi 0, %s49
      %s31 = sphi 0, %s45
      %s32 = sphi 0, %s41
      %s33 = sphi 0, %s30
      %s34 = sphi 0, %s31
      %s35 = sphi 0, %s32
      %s36 = sphi 0, %s33
      %s37 = sphi 0, %s34
      %s38 = sphi 0, %s35
      %s56 = sphi 0, %s58
      %s59 = sphi 0, %s56
      %s60 = sphi 0, %s59
      %s76 = sphi 0, %s60
      %s84 = sphi 0, %s86
      %s87 = sphi 0, %s84
      %s88 = sphi 0, %s87
      %s104 = sphi 0, %s88
      %s110 = sphi 0, %s112
      %s113 = sphi 0, %s110
      %s114 = sphi 0, %s113
      %s130 = sphi 0, %s114
      %s136 = sphi 0, %s138
      %s139 = sphi 0, %s136
      %s140 = sphi 0, %s139
      %s156 = sphi 0, %s140
      %s164 = sphi 0, %s166
      %s167 = sphi 0, %s164
      %s168 = sphi 0, %s167
      %s184 = sphi 0, %s168
    $region4: #{tpu_custom_call.1} parent=1 // loop_header_branch
      %26 = sbr.rel (%p24) target = $region8
    $region5: #{tpu_custom_call.1} parent=1 // loop_body
      %s28 = ssub.s32 %s23, 1
      %s29 = ssub.s32 %s23, 2
      %s39 = sadd.s32 1, %s32
      %p40 = scmp.ge.s32.totalorder %s39, 4
      %s41 = scalar_select %p40, 0, %s39
      %s42 = sadd.s32 1, %s31
      %s43 = scalar_select %p40, %s42, %s31
      %p44 = scmp.ge.s32.totalorder %s43, 2
      %s45 = scalar_select %p44, 0, %s43
      %s46 = sadd.s32 1, %s30
      %s47 = scalar_select %p44, %s46, %s30
      %p48 = scmp.ge.s32.totalorder %s47, 2
      %s49 = scalar_select %p48, 0, %s47
      %s50 = ssub.s32 %s32, %s41
      %s51 = ssub.s32 %s30, %s49
      %s52 = sor.u32 %s50, %s51
      %s53 = ssub.s32 %s31, %s45
      %s54 = sor.u32 %s52, %s53
      %p55 = scmp.eq.s32.totalorder %s54, 0
      %s57 = sadd.s32 %s56, 1
      %s58 = scalar_select %p55, %s56, %s57
      %p61 = pneg %p55
      %p62 = scmp.eq.s32.totalorder %s23, 15
      %p63 = por %p61, %p62
      %p64 = scmp.ne.s32.totalorder %s56, %s59
      %p65 = scmp.eq.s32.totalorder %s23, 0
      %p66 = por %p64, %p65
      %p67 = scmp.ne.s32.totalorder %s56, %s59
      %p68 = scmp.eq.s32.totalorder %s28, 15
      %p69 = por %p67, %p68
      %p70 = scmp.ne.s32.totalorder %s59, %s60
      %p71 = scmp.eq.s32.totalorder %s28, 0
      %p72 = por %p70, %p71
      %p73 = scmp.ne.s32.totalorder %s59, %s60
      %p74 = scmp.eq.s32.totalorder %s29, 15
      %p75 = por %p73, %p74
      %p77 = scmp.ne.s32.totalorder %s60, %s76
      %p78 = scmp.eq.s32.totalorder %s29, 0
      %p79 = por %p77, %p78
      %s80 = ssub.s32 %s30, %s49
      %s81 = ssub.s32 %s31, %s45
      %s82 = sor.u32 %s80, %s81
      %p83 = scmp.eq.s32.totalorder %s82, 0
      %s85 = sadd.s32 %s84, 1
      %s86 = scalar_select %p83, %s84, %s85
      %p89 = pneg %p83
      %p90 = scmp.eq.s32.totalorder %s23, 15
      %p91 = por %p89, %p90
      %p92 = scmp.ne.s32.totalorder %s84, %s87
      %p93 = scmp.eq.s32.totalorder %s23, 0
      %p94 = por %p92, %p93
      %p95 = scmp.ne.s32.totalorder %s84, %s87
      %p96 = scmp.eq.s32.totalorder %s28, 15
      %p97 = por %p95, %p96
      %p98 = scmp.ne.s32.totalorder %s87, %s88
      %p99 = scmp.eq.s32.totalorder %s28, 0
      %p100 = por %p98, %p99
      %p101 = scmp.ne.s32.totalorder %s87, %s88
      %p102 = scmp.eq.s32.totalorder %s29, 15
      %p103 = por %p101, %p102
      %p105 = scmp.ne.s32.totalorder %s88, %s104
      %p106 = scmp.eq.s32.totalorder %s29, 0
      %p107 = por %p105, %p106
      %s108 = ssub.s32 %s31, %s45
      %p109 = scmp.eq.s32.totalorder %s108, 0
      %s111 = sadd.s32 %s110, 1
      %s112 = scalar_select %p109, %s110, %s111
      %p115 = pneg %p109
      %p116 = scmp.eq.s32.totalorder %s23, 15
      %p117 = por %p115, %p116
      %p118 = scmp.ne.s32.totalorder %s110, %s113
      %p119 = scmp.eq.s32.totalorder %s23, 0
      %p120 = por %p118, %p119
      %p121 = scmp.ne.s32.totalorder %s110, %s113
      %p122 = scmp.eq.s32.totalorder %s28, 15
      %p123 = por %p121, %p122
      %p124 = scmp.ne.s32.totalorder %s113, %s114
      %p125 = scmp.eq.s32.totalorder %s28, 0
      %p126 = por %p124, %p125
      %p127 = scmp.ne.s32.totalorder %s113, %s114
      %p128 = scmp.eq.s32.totalorder %s29, 15
      %p129 = por %p127, %p128
      %p131 = scmp.ne.s32.totalorder %s114, %s130
      %p132 = scmp.eq.s32.totalorder %s29, 0
      %p133 = por %p131, %p132
      %s134 = ssub.s32 %s30, %s49
      %p135 = scmp.eq.s32.totalorder %s134, 0
      %s137 = sadd.s32 %s136, 1
      %s138 = scalar_select %p135, %s136, %s137
      %p141 = pneg %p135
      %p142 = scmp.eq.s32.totalorder %s23, 15
      %p143 = por %p141, %p142
      %p144 = scmp.ne.s32.totalorder %s136, %s139
      %p145 = scmp.eq.s32.totalorder %s23, 0
      %p146 = por %p144, %p145
      %p147 = scmp.ne.s32.totalorder %s136, %s139
      %p148 = scmp.eq.s32.totalorder %s28, 15
      %p149 = por %p147, %p148
      %p150 = scmp.ne.s32.totalorder %s139, %s140
      %p151 = scmp.eq.s32.totalorder %s28, 0
      %p152 = por %p150, %p151
      %p153 = scmp.ne.s32.totalorder %s139, %s140
      %p154 = scmp.eq.s32.totalorder %s29, 15
      %p155 = por %p153, %p154
      %p157 = scmp.ne.s32.totalorder %s140, %s156
      %p158 = scmp.eq.s32.totalorder %s29, 0
      %p159 = por %p157, %p158
      %s160 = ssub.s32 %s30, %s49
      %s161 = ssub.s32 %s31, %s45
      %s162 = sor.u32 %s160, %s161
      %p163 = scmp.eq.s32.totalorder %s162, 0
      %s165 = sadd.s32 %s164, 1
      %s166 = scalar_select %p163, %s164, %s165
      %p169 = pneg %p163
      %p170 = scmp.eq.s32.totalorder %s23, 15
      %p171 = por %p169, %p170
      %p172 = scmp.ne.s32.totalorder %s164, %s167
      %p173 = scmp.eq.s32.totalorder %s23, 0
      %p174 = por %p172, %p173
      %p175 = scmp.ne.s32.totalorder %s164, %s167
      %p176 = scmp.eq.s32.totalorder %s28, 15
      %p177 = por %p175, %p176
      %p178 = scmp.ne.s32.totalorder %s167, %s168
      %p179 = scmp.eq.s32.totalorder %s28, 0
      %p180 = por %p178, %p179
      %p181 = scmp.ne.s32.totalorder %s167, %s168
      %p182 = scmp.eq.s32.totalorder %s29, 15
      %p183 = por %p181, %p182
      %p185 = scmp.ne.s32.totalorder %s168, %s184
      %p186 = scmp.eq.s32.totalorder %s29, 0
      %p187 = por %p185, %p186
      %p188 = scmp.le.s32.totalorder 1, %s23
      %p189 = scmp.lt.s32.totalorder %s23, 17
      %p190 = pnand %p188, %p189
      %p191 = pneg %p190
      // Predicated region
      $region9: #{tpu_custom_call.1} parent=5 // pred_check
        _
      $region10: #{tpu_custom_call.1} parent=5 // pred_check_branch
        %193 = sbr.rel (%p190) target = $region12
      $region11: #{tpu_custom_call.1} parent=5 // pred_region
        %s194 = ssub.s32 %s23, 1
      $region12: #{tpu_custom_call.1} parent=5 // pred_fallthru
        _
      %p195 = scmp.lt.s32.totalorder %s23, 16
      // Predicated region
      $region13: #{tpu_custom_call.1} parent=5 // pred_check
        %p196 = pneg %p195
      $region14: #{tpu_custom_call.1} parent=5 // pred_check_branch
        %198 = sbr.rel (%p196) target = $region16
      $region15: #{tpu_custom_call.1} parent=5 // pred_region
        // Predicated region
        $region17: #{tpu_custom_call.1} parent=15 // pred_check
          %p199 = pneg %p66
        $region18: #{tpu_custom_call.1} parent=15 // pred_check_branch
          %201 = sbr.rel (%p199) target = $region20
        $region19: #{tpu_custom_call.1} parent=15 // pred_region
          %s202 = sand.u32 %s56, 1
          %s203 = scalar_lea.sflag [#allocation11], %s202
          %s204 = sand.u32 %s56, 1
          %s205 = smul.addr %s204, 8
          %s206 = scalar_lea.vmem [#allocation10], %s205
          %s208 = ssub.s32 128, 128
          %209 = vsyncadd %s203, %s208
          %s210 = smul.addr %s30, 2
          %s211 = sadd.s32 %s31, %s210
          %s212 = smul.addr %s32, 4
          %s213 = sadd.s32 %s211, %s212
          %s214 = smul.addr %s213, 128
          %s215 = scalar_lea.hbm %s0, %s214
          %s217 = sshll.u32 %s206, 4
          %s218 = int_to_ptr.vmem [resolvable:$true] %s217
          %220 = dma.hbm_to_vmem [thread:$0]  %s215, 128, %s218, %s203
        $region20: #{tpu_custom_call.1} parent=15 // pred_fallthru
          _
        // Predicated region
        $region21: #{tpu_custom_call.1} parent=15 // pred_check
          %p221 = pneg %p94
        $region22: #{tpu_custom_call.1} parent=15 // pred_check_branch
          %223 = sbr.rel (%p221) target = $region24
        $region23: #{tpu_custom_call.1} parent=15 // pred_region
          %s224 = sand.u32 %s84, 1
          %s225 = scalar_lea.sflag [#allocation14], %s224
          %s226 = sand.u32 %s84, 1
          %s227 = smul.addr %s226, 16
          %s228 = scalar_lea.vmem [#allocation13], %s227
          %s230 = ssub.s32 256, 256
          %231 = vsyncadd %s225, %s230
          %s232 = smul.addr %s30, 2
          %s233 = sadd.s32 %s31, %s232
          %s234 = smul.addr %s233, 128
          %s235 = scalar_lea.hbm %s1, %s234
          %s236 = sshll.u32 %s228, 4
          %s237 = int_to_ptr.vmem [resolvable:$true] %s236
          %242 = dma.hbm_to_vmem [thread:$0]  %s235, 256, %s237, %s225, 512, 128, 8
        $region24: #{tpu_custom_call.1} parent=15 // pred_fallthru
          _
        // Predicated region
        $region25: #{tpu_custom_call.1} parent=15 // pred_check
          %p243 = pneg %p120
        $region26: #{tpu_custom_call.1} parent=15 // pred_check_branch
          %245 = sbr.rel (%p243) target = $region28
        $region27: #{tpu_custom_call.1} parent=15 // pred_region
          %p246 = scmp.lt.s32.totalorder %s31, 1
          %s247 = scalar_select %p246, %s31, 1
          %s248 = scalar_lea.vmem %s2, %s247
        $region28: #{tpu_custom_call.1} parent=15 // pred_fallthru
          _
      $region16: #{tpu_custom_call.1} parent=5 // pred_fallthru
        _
      %p249 = scmp.le.s32.totalorder 1, %s23
      %p250 = scmp.lt.s32.totalorder %s23, 17
      %p251 = pnand %p249, %p250
      %p252 = pneg %p251
      // Predicated region
      $region29: #{tpu_custom_call.1} parent=5 // pred_check
        _
      $region30: #{tpu_custom_call.1} parent=5 // pred_check_branch
        %254 = sbr.rel (%p251) target = $region32
      $region31: #{tpu_custom_call.1} parent=5 // pred_region
        %s255 = ssub.s32 %s23, 1
        %s256 = sand.u32 %s59, 1
        %s257 = scalar_lea.sflag [#allocation11], %s256
        %s258 = sand.u32 %s59, 1
        %s259 = smul.addr %s258, 8
        %s260 = scalar_lea.vmem [#allocation10], %s259
        // Predicated region
        $region33: #{tpu_custom_call.1} parent=31 // pred_check
          %p261 = pneg %p72
        $region34: #{tpu_custom_call.1} parent=31 // pred_check_branch
          %263 = sbr.rel (%p261) target = $region36
        $region35: #{tpu_custom_call.1} parent=31 // pred_region
          %264 = dma.done %s257, 128
        $region36: #{tpu_custom_call.1} parent=31 // pred_fallthru
          _
        %s265 = sand.u32 %s87, 1
        %s266 = scalar_lea.sflag [#allocation14], %s265
        %s267 = sand.u32 %s87, 1
        %s268 = smul.addr %s267, 16
        %s269 = scalar_lea.vmem [#allocation13], %s268
        // Predicated region
        $region37: #{tpu_custom_call.1} parent=31 // pred_check
          %p270 = pneg %p100
        $region38: #{tpu_custom_call.1} parent=31 // pred_check_branch
          %272 = sbr.rel (%p270) target = $region40
        $region39: #{tpu_custom_call.1} parent=31 // pred_region
          %273 = dma.done %s266, 256
        $region40: #{tpu_custom_call.1} parent=31 // pred_fallthru
          _
        %s274 = sand.u32 %s59, 1
        %s275 = scalar_lea.sflag [#allocation11], %s274
        %s276 = sand.u32 %s59, 1
        %s277 = smul.addr %s276, 8
        %s278 = scalar_lea.vmem [#allocation10], %s277
        %p279 = pneg %p72
        %p280 = pneg %p69
        %s281 = sand.u32 %s87, 1
        %s282 = scalar_lea.sflag [#allocation14], %s281
        %s283 = sand.u32 %s87, 1
        %s284 = smul.addr %s283, 16
        %s285 = scalar_lea.vmem [#allocation13], %s284
        %p286 = pneg %p100
        %p287 = pneg %p97
        %p288 = scmp.lt.s32.totalorder %s34, 1
        %s289 = scalar_select %p288, %s34, 1
        %s290 = scalar_lea.vmem %s2, %s289
        %p291 = pneg %p126
        %p292 = pneg %p123
        %p293 = pneg %p152
        %p294 = pneg %p149
        %s295 = sand.u32 %s139, 1
        %s296 = scalar_lea.sflag [#allocation12], %s295
        %s297 = sand.u32 %s139, 1
        %s298 = smul.addr %s297, 8
        %s299 = scalar_lea.vmem [#allocation15], %s298
        %p300 = pneg %p180
        %p301 = pneg %p177
        %s302 = sand.u32 %s167, 1
        %s303 = scalar_lea.sflag [#allocation17], %s302
        %s304 = sand.u32 %s167, 1
        %s305 = smul.addr %s304, 8
        %s306 = scalar_lea.vmem [#allocation16], %s305
        %p307 = scmp.lt.s32.totalorder %s34, 1
        %s308 = scalar_select %p307, %s34, 1
        %s309 = scalar_lea.vmem %s2, %s308
        %p310 = scmp.eq.s32.totalorder %s34, 0
        %p311 = scmp.eq.s32.totalorder %s35, 0
        %p312 = pnand %p310, %p311
        %p313 = pneg %p312
        // Predicated region
        $region41: #{tpu_custom_call.1} parent=31 // pred_check
          _
        $region42: #{tpu_custom_call.1} parent=31 // pred_check_branch
          %315 = sbr.rel (%p312) target = $region44
        $region43: #{tpu_custom_call.1} parent=31 // pred_region
          %316 = vst [vmem:[%s299] sm:$0xff] 0.0
        $region44: #{tpu_custom_call.1} parent=31 // pred_fallthru
          _
        // Predicated region
        $region45: #{tpu_custom_call.1} parent=31 // pred_check
          %p317 = pneg %p311
        $region46: #{tpu_custom_call.1} parent=31 // pred_check_branch
          %319 = sbr.rel (%p317) target = $region48
        $region47: #{tpu_custom_call.1} parent=31 // pred_region
          // Predicated region
          $region49: #{tpu_custom_call.1} parent=47 // pred_check
            %p320 = pneg %p310
          $region50: #{tpu_custom_call.1} parent=47 // pred_check_branch
            %322 = sbr.rel (%p320) target = $region52
          $region51: #{tpu_custom_call.1} parent=47 // pred_region
            %vm323 = vcmask 7168
            %324 = vst.msk [vmem:[#allocation3] sm:$0xff] %vm323, -inf
            %325 = vst.msk [vmem:[#allocation3 + $0x8] sm:$0xff] %vm323, -inf
            %326 = vst.msk [vmem:[#allocation4] sm:$0xff] %vm323, 0.0
            %327 = vst.msk [vmem:[#allocation4 + $0x8] sm:$0xff] %vm323, 0.0
          $region52: #{tpu_custom_call.1} parent=47 // pred_fallthru
            _
          %v328 = vld [vmem:[%s269] sm:$0xff]
          %v329 = vld [vmem:[%s269 + $0x8] sm:$0xff]
          %v330 = vld [vmem:[%s309] sm:$0x1]
          %v332 = vlaneseq
          %v333 = vshrl.u32 %v332, 7
          %v334 = vsub.s32 0, %v333
          %v335 = vrot.slane %v330, %v334
          %v337 = vsub.f32 %v328, %v335
          %v338 = vsub.f32 %v329, %v335
          %v339 = vmul.f32 %v337, 25.0
          %v340 = vmul.f32 %v338, 25.0
          %341 = vmax.xlane.f32.xlu0 %v339
          %v342 = vpop.xlane.xlu0 %341
          %343 = vmax.xlane.f32.xlu0 %v340
          %v344 = vpop.xlane.xlu0 %343
          %v345 = vld [vmem:[#allocation3] sm:$0xff]
          %v346 = vld [vmem:[#allocation3 + $0x8] sm:$0xff]
          %v347 = vmax.f32 %v345, %v342
          %v348 = vmax.f32 %v346, %v344
          %v349 = vsub.f32 %v345, %v347
          %v350 = vsub.f32 %v346, %v348
          %v351 = vmul.f32 %v349, 1.442695
          %v352 = vpow.pop %v351
          %v353 = vmul.f32 %v350, 1.442695
          %v354 = vpow.pop %v353
          %356 = vset.pattern.permute.xlu0 0
          %357 = vperm.xlu0 %356, %v347
          %v358 = vpop.permute.xlu0 %357
          %361 = vset.pattern.permute.xlu0 0
          %362 = vperm.xlu0 %361, %v348
          %v363 = vpop.permute.xlu0 %362
          %v365 = vsub.f32 %v339, %v358
          %v366 = vsub.f32 %v340, %v363
          %v367 = vmul.f32 %v365, 1.442695
          %v368 = vpow.pop %v367
          %v369 = vmul.f32 %v366, 1.442695
          %v370 = vpow.pop %v369
          %v371 = vld [vmem:[#allocation4] sm:$0xff]
          %v372 = vld [vmem:[#allocation4 + $0x8] sm:$0xff]
          %v373 = vmul.f32 %v352, %v371
          %v374 = vmul.f32 %v354, %v372
          %375 = vadd.xlane.f32.xlu0 %v368
          %v376 = vpop.xlane.xlu0 %375
          %377 = vadd.xlane.f32.xlu0 %v370
          %v378 = vpop.xlane.xlu0 %377
          %v379 = vadd.f32 %v373, %v376
          %v380 = vadd.f32 %v374, %v378
          %vm381 = vcmask 7168
          %382 = vst.msk [vmem:[#allocation4] sm:$0xff] %vm381, %v379
          %383 = vst.msk [vmem:[#allocation4 + $0x8] sm:$0xff] %vm381, %v380
          %384 = vst.msk [vmem:[#allocation3] sm:$0xff] %vm381, %v347
          %385 = vst.msk [vmem:[#allocation3 + $0x8] sm:$0xff] %vm381, %v348
          %386 = vst.msk [vmem:[#allocation5] sm:$0xff] %vm381, %v352
          %387 = vst.msk [vmem:[#allocation5 + $0x8] sm:$0xff] %vm381, %v354
          %388 = vst [vmem:[#allocation2] sm:$0xff] %v368
          %389 = vst [vmem:[#allocation2 + $0x8] sm:$0xff] %v370
          %v390 = vadd.f32 %v328, %v329
          %v391 = vrot.slane %v390, 4
          %v392 = vadd.f32 %v390, %v391
          %v393 = vrot.slane %v392, 2
          %v394 = vadd.f32 %v392, %v393
          %v395 = vrot.slane %v394, 1
          %v396 = vadd.f32 %v394, %v395
          %397 = vst [vmem:[%s306] sm:$0xff] %v396
        $region48: #{tpu_custom_call.1} parent=31 // pred_fallthru
          _
        // Predicated region
        $region53: #{tpu_custom_call.1} parent=31 // pred_check
          %p398 = pneg %p310
        $region54: #{tpu_custom_call.1} parent=31 // pred_check_branch
          %400 = sbr.rel (%p398) target = $region56
        $region55: #{tpu_custom_call.1} parent=31 // pred_region
          %s401 = smul.u32 %s35, 8
          %s402 = scalar_lea.vmem [#allocation6], %s401
          %vm403 = vcmask 7168
          %404 = vst.msk [vmem:[%s402] sm:$0xff] %vm403, -inf
          %s405 = scalar_lea.vmem [#allocation7], %s401
          %406 = vst.msk [vmem:[%s405] sm:$0xff] %vm403, 0.0
          %s407 = scalar_lea.vmem [#allocation8], %s401
          %408 = vst.msk [vmem:[%s407] sm:$0xff] %vm403, 0.0
          %s409 = scalar_lea.vmem [#allocation9], %s401
          %410 = vst.msk [vmem:[%s409] sm:$0xff] %vm403, 0.0
        $region56: #{tpu_custom_call.1} parent=31 // pred_fallthru
          _
        %v411 = vld [vmem:[%s260] sm:$0xff]
        %v412 = vmul.f32 %v411, 10.0
        %413 = vmax.xlane.f32.xlu0 %v412
        %v414 = vpop.xlane.xlu0 %413
        %s415 = smul.u32 %s35, 8
        %s416 = scalar_lea.vmem [#allocation6], %s415
        %v417 = vld [vmem:[%s416] sm:$0xff]
        %v418 = vmax.f32 %v417, %v414
        %v419 = vsub.f32 %v417, %v418
        %v420 = vmul.f32 %v419, 1.442695
        %v421 = vpow.pop %v420
        %423 = vset.pattern.permute.xlu0 0
        %424 = vperm.xlu0 %423, %v418
        %v425 = vpop.permute.xlu0 %424
        %v427 = vsub.f32 %v412, %v425
        %v428 = vmul.f32 %v427, 1.442695
        %v429 = vpow.pop %v428
        %s430 = scalar_lea.vmem [#allocation7], %s415
        %v431 = vld [vmem:[%s430] sm:$0xff]
        %v432 = vmul.f32 %v421, %v431
        %433 = vadd.xlane.f32.xlu0 %v429
        %v434 = vpop.xlane.xlu0 %433
        %v435 = vadd.f32 %v432, %v434
        %vm436 = vcmask 7168
        %437 = vst.msk [vmem:[%s430] sm:$0xff] %vm436, %v435
        %438 = vst.msk [vmem:[%s416] sm:$0xff] %vm436, %v418
        %v439 = vld [vmem:[#allocation5] sm:$0xff]
        %v440 = vld [vmem:[#allocation5 + $0x8] sm:$0xff]
        %v441 = vld [vmem:[#allocation2] sm:$0xff]
        %v442 = vmul.f32 %v441, %v412
        %443 = vadd.xlane.f32.xlu0 %v442
        %v444 = vpop.xlane.xlu0 %443
        %s445 = scalar_lea.vmem [#allocation2], 8
        %v446 = vld [vmem:[%s445] sm:$0xff]
        %v447 = vmul.f32 %v446, %v412
        %448 = vadd.xlane.f32.xlu0 %v447
        %v449 = vpop.xlane.xlu0 %448
        %s450 = scalar_lea.vmem [#allocation8], %s415
        %v451 = vld [vmem:[%s450] sm:$0xff]
        %v452 = vmul.f32 %v439, %v451
        %v453 = vadd.f32 %v452, %v444
        %454 = vst.msk [vmem:[%s450] sm:$0xff] %vm436, %v453
        %s455 = scalar_lea.vmem [#allocation9], %s415
        %v456 = vld [vmem:[%s455] sm:$0xff]
        %v457 = vmul.f32 %v440, %v456
        %v458 = vadd.f32 %v457, %v449
        %459 = vst.msk [vmem:[%s455] sm:$0xff] %vm436, %v458
        %p460 = scmp.eq.s32.totalorder %s34, 1
        // Predicated region
        $region57: #{tpu_custom_call.1} parent=31 // pred_check
          %p461 = pneg %p460
        $region58: #{tpu_custom_call.1} parent=31 // pred_check_branch
          %463 = sbr.rel (%p461) target = $region60
        $region59: #{tpu_custom_call.1} parent=31 // pred_region
          %v464 = vld [vmem:[%s416] sm:$0xff]
          %v465 = vld [vmem:[%s430] sm:$0xff]
          %v466 = vlog2.pop %v465
          %v467 = vmul.f32 %v466, 0.6931472
          %v468 = vadd.f32 %v464, %v467
          %v469 = vld [vmem:[%s450] sm:$0xff]
          %v470 = vld [vmem:[#allocation4] sm:$0xff]
          %v471 = vrcp.pop %v470
          %v472 = vmul.f32 %v469, %v471
          %v473 = vsub.f32 %v468, %v472
          %v474 = vld [vmem:[%s455] sm:$0xff]
          %s475 = scalar_lea.vmem [#allocation4], 8
          %v476 = vld [vmem:[%s475] sm:$0xff]
          %v477 = vrcp.pop %v476
          %v478 = vmul.f32 %v474, %v477
          %v479 = vsub.f32 %v468, %v478
          %p480 = scmp.ne.s32.totalorder %s35, 0
          %s481 = scalar_select %p480, 1.0, 0.0
          %p482 = scmp.ne.s32.totalorder %s35, 1
          %s483 = scalar_select %p482, 1.0, 0.0
          %v484 = vstv %s481
          %v485 = vmul.f32 %v484, %v473
          %v486 = vstv %s483
          %v487 = vmul.f32 %v486, %v479
          %v488 = vadd.f32 %v485, %v487
          %v489 = vsel %vm436, %v488, 0.0
          %490 = vadd.xlane.f32.xlu0 %v489
          %v491 = vpop.xlane.xlu0 %490
          %v492 = vrot.slane %v491, 4
          %v493 = vadd.f32 %v491, %v492
          %v494 = vrot.slane %v493, 2
          %v495 = vadd.f32 %v493, %v494
          %v496 = vrot.slane %v495, 1
          %v497 = vadd.f32 %v495, %v496
          %s498 = vtos %v497
          %s499 = smul.f32 %s498, 0.010416667
          %v500 = vld [vmem:[%s299] sm:$0xff]
          %v501 = vstv %s499
          %v502 = vadd.f32 %v500, %v501
          %503 = vst [vmem:[%s299] sm:$0xff] %v502
        $region60: #{tpu_custom_call.1} parent=31 // pred_fallthru
          _
        %s504 = sand.u32 %s139, 1
        %s505 = scalar_lea.sflag [#allocation12], %s504
        %s506 = sand.u32 %s139, 1
        %s507 = smul.addr %s506, 8
        %s508 = scalar_lea.vmem [#allocation15], %s507
        %s509 = sand.u32 %s167, 1
        %s510 = scalar_lea.sflag [#allocation17], %s509
        %s511 = sand.u32 %s167, 1
        %s512 = smul.addr %s511, 8
        %s513 = scalar_lea.vmem [#allocation16], %s512
        // Predicated region
        $region61: #{tpu_custom_call.1} parent=31 // pred_check
          %p514 = pneg %p149
        $region62: #{tpu_custom_call.1} parent=31 // pred_check_branch
          %516 = sbr.rel (%p514) target = $region64
        $region63: #{tpu_custom_call.1} parent=31 // pred_region
          %s518 = ssub.s32 128, 128
          %519 = vsyncadd %s505, %s518
          %s520 = smul.addr %s33, 128
          %s521 = scalar_lea.hbm %s3, %s520
          %s523 = sshll.u32 %s508, 4
          %s524 = int_to_ptr.vmem [resolvable:$true] %s523
          %526 = dma.vmem_to_hbm [thread:$0]  %s524, 128, %s521, %s505
        $region64: #{tpu_custom_call.1} parent=31 // pred_fallthru
          _
        // Predicated region
        $region65: #{tpu_custom_call.1} parent=31 // pred_check
          %p527 = pneg %p177
        $region66: #{tpu_custom_call.1} parent=31 // pred_check_branch
          %529 = sbr.rel (%p527) target = $region68
        $region67: #{tpu_custom_call.1} parent=31 // pred_region
          %s531 = ssub.s32 128, 128
          %532 = vsyncadd %s510, %s531
          %s533 = smul.addr %s33, 2
          %s534 = sadd.s32 %s34, %s533
          %s535 = smul.addr %s534, 128
          %s536 = scalar_lea.hbm %s4, %s535
          %s538 = sshll.u32 %s513, 4
          %s539 = int_to_ptr.vmem [resolvable:$true] %s538
          %541 = dma.vmem_to_hbm [thread:$0]  %s539, 128, %s536, %s510
        $region68: #{tpu_custom_call.1} parent=31 // pred_fallthru
          _
      $region32: #{tpu_custom_call.1} parent=5 // pred_fallthru
        _
      %p542 = scmp.le.s32.totalorder 2, %s23
      // Predicated region
      $region69: #{tpu_custom_call.1} parent=5 // pred_check
        %p543 = pneg %p542
      $region70: #{tpu_custom_call.1} parent=5 // pred_check_branch
        %545 = sbr.rel (%p543) target = $region72
      $region71: #{tpu_custom_call.1} parent=5 // pred_region
        %s546 = ssub.s32 %s23, 2
        // Predicated region
        $region73: #{tpu_custom_call.1} parent=71 // pred_check
          %p547 = pneg %p155
        $region74: #{tpu_custom_call.1} parent=71 // pred_check_branch
          %549 = sbr.rel (%p547) target = $region76
        $region75: #{tpu_custom_call.1} parent=71 // pred_region
          %s550 = sand.u32 %s140, 1
          %s551 = scalar_lea.sflag [#allocation12], %s550
          %s552 = sand.u32 %s140, 1
          %s553 = smul.addr %s552, 8
          %s554 = scalar_lea.vmem [#allocation15], %s553
          %555 = dma.done %s551, 128
        $region76: #{tpu_custom_call.1} parent=71 // pred_fallthru
          _
        // Predicated region
        $region77: #{tpu_custom_call.1} parent=71 // pred_check
          %p556 = pneg %p183
        $region78: #{tpu_custom_call.1} parent=71 // pred_check_branch
          %558 = sbr.rel (%p556) target = $region80
        $region79: #{tpu_custom_call.1} parent=71 // pred_region
          %s559 = sand.u32 %s168, 1
          %s560 = scalar_lea.sflag [#allocation17], %s559
          %s561 = sand.u32 %s168, 1
          %s562 = smul.addr %s561, 8
          %s563 = scalar_lea.vmem [#allocation16], %s562
          %564 = dma.done %s560, 128
        $region80: #{tpu_custom_call.1} parent=71 // pred_fallthru
          _
      $region72: #{tpu_custom_call.1} parent=5 // pred_fallthru
        _
    $region6: #{tpu_custom_call.1} parent=1 // loop_footer
      %s27 = sadd.s32 1, %s23
    $region7: #{tpu_custom_call.1} parent=1 // loop_footer_branch
      %22 = sbr.rel target = $region3
    $region8: #{tpu_custom_call.1} parent=1 // loop_exit
      _
    %565 = vsyncpa [#allocation11], 1
    %s566 = scalar_lea.sflag [#allocation11], 1
    %567 = vsyncpa %s566, 1
    %568 = vsyncpa [#allocation14], 1
    %s569 = scalar_lea.sflag [#allocation14], 1
    %570 = vsyncpa %s569, 1
    %571 = vsyncpa [#allocation12], 1
    %s572 = scalar_lea.sflag [#allocation12], 1
    %573 = vsyncpa %s572, 1
    %574 = vsyncpa [#allocation17], 1
    %s575 = scalar_lea.sflag [#allocation17], 1
    %576 = vsyncpa %s575, 1

</llo_original>
